<compile_context>
chip_gen: v7x
topology: tpu7x:2x2x1
jax: 0.10.0
libtpu: 0.0.40
codegen_flags: <defaults>
</compile_context>

<pallas_src>
import math

import jax
import jax.numpy as jnp
from jax.experimental import pallas as pl
from jax.experimental.pallas import tpu as pltpu


# --------------------------- GraphLearn kernel ------------------------------

def _graph_learn_kernel(A_ref, lhs_ref, rhs_t_ref, beta_ref, attn_ref, eps_ref,
                        o_ref):
    A = A_ref[...]                                    # (N, N)
    N = A.shape[0]
    rows = jax.lax.broadcasted_iota(jnp.int32, (N, N), 0)
    cols = jax.lax.broadcasted_iota(jnp.int32, (N, N), 1)
    diag = rows == cols

    # new_adj = w1 @ w2.T - w2 @ w1.T, fused as a single MXU call
    # [w1 | -w2] @ [w2 | w1]^T  (operands pre-concatenated / pre-transposed outside).
    m = jnp.dot(lhs_ref[...], rhs_t_ref[...], preferred_element_type=jnp.float32)

    # relu(new_adj + diag(beta))
    m = jnp.maximum(m + jnp.where(diag, beta_ref[...], 0.0), 0.0)

    # 1x1 Conv2d(2 -> 1) over stacked (new_adj, adj) == wa*new_adj + wb*adj + b
    wa = attn_ref[0]
    wb = attn_ref[1]
    bb = attn_ref[2]
    attn = jax.nn.sigmoid(wa * m + wb * A + bb)
    m = attn * m + (1.0 - attn) * A

    eps = eps_ref[0]

    def sym_norm(mat):
        # D^{-1/2} mat D^{-1/2} done elementwise (no NxN matmuls for diagonal work).
        s = jnp.maximum(jnp.sum(mat, axis=1, keepdims=True), 1e-12)  # clamp: no inf
        d_col = jax.lax.rsqrt(s)                                     # (N, 1)
        # lane-oriented copy of d via diag-select + sublane reduction (no transpose)
        d_row = jnp.sum(jnp.where(diag, d_col, 0.0), axis=0, keepdims=True)  # (1, N)
        return mat * d_col * d_row

    # first symmetric normalization, shift by eps, relu; then second normalization
    m = jnp.maximum(sym_norm(m) - eps, 0.0)
    o_ref[...] = sym_norm(m)


def graph_learn(A, w1, w2, beta, attn_params, eps):
    N = A.shape[0]
    lhs = jnp.concatenate([w1, -w2], axis=1)       # (N, 2F)
    rhs_t = jnp.concatenate([w2, w1], axis=1).T    # (2F, N)
    vmem = pl.BlockSpec(memory_space=pltpu.MemorySpace.VMEM)
    smem = pl.BlockSpec(memory_space=pltpu.MemorySpace.SMEM)
    return pl.pallas_call(
        _graph_learn_kernel,
        out_shape=jax.ShapeDtypeStruct((N, N), jnp.float32),
        in_specs=[vmem, vmem, vmem, vmem, smem, smem],
        out_specs=vmem,
    )(A, lhs, rhs_t, beta.reshape(1, N),
      attn_params.astype(jnp.float32), jnp.asarray([eps], jnp.float32))


# --------------------------- ChebConv + ReLU kernel --------------------------

def _cheb_kernel(x_ref, t_ref, b_ref, o_ref):
    # x_ref: (TB, N*Cin) bf16   t_ref: (N*Cin, N*Cout) bf16   b_ref: (1, N*Cout) f32
    # o_ref: (TB, N*Cout) f32 -- one lane-dense MXU matmul (f32 accumulation)
    # + bias + fused ReLU.
    y = jnp.dot(x_ref[...], t_ref[...], preferred_element_type=jnp.float32)
    o_ref[...] = jnp.maximum(y + b_ref[...], 0.0)


def _choose_block_bs(BS, target=256):
    """TB is the M (sublane) dim of the matmul; the contraction lanes are already
    N*Cin regardless of TB.  Target TB~=256 (fills the MXU M dim, amortizes the
    ~0.35us per-grid-step overhead), sublane-aligned, and keep >=2 grid steps
    whenever BS allows so both v7x TensorCores get work."""
    tb = min(target, BS)
    tb = max(8, ((tb + 7) // 8) * 8)                 # sublane alignment
    if pl.cdiv(BS, tb) < 2 and BS > 8:               # keep >=2 steps for megacore
        half = (BS + 1) // 2
        tb = max(8, ((half + 7) // 8) * 8)
    return tb


def _vmem_budget_bytes(TB, N, Cin, Cout):
    """Explicit VMEM budget: worst case is the fallback plan where the resident
    bf16 operator gets default double-buffering; cap at 56 MiB so the plan still
    fits v7x's 64 MiB per-TC VMEM (v5e/v6e have 128 MiB so the cap is safe)."""
    t_bytes = N * Cin * N * Cout * 2 * 2             # bf16 operator, <=2 buffers
    bias_bytes = N * Cout * 4 * 2
    x_bytes = TB * N * Cin * 2 * 3                   # bf16 input, Buffered(3)
    out_bytes = TB * N * Cout * 4 * 2                # f32 output, double-buffered
    total = t_bytes + bias_bytes + x_bytes + out_bytes
    return int(min(max(total * 1.3 + (2 << 20), 32 << 20), 56 << 20))


def cheb_conv_relu(mul_L, weight, bias, x_flat, *, block_bs=None):
    BS, N, Cin = x_flat.shape
    K, _, Cout = weight.shape
    TB = block_bs or _choose_block_bs(BS)

    # Fuse the K Chebyshev terms AND the weight contraction into one resident
    # operator (built once per forward by XLA; depends only on graph + weights):
    #   T[(m,c),(n,o)] = sum_k L_k[n,m] * W_k[c,o]
    # so each grid step is a single (TB, N*Cin) @ (N*Cin, N*Cout) MXU matmul with
    # lane-dense input and output and zero in-kernel relayouts.  bf16 operands,
    # f32 accumulation (preferred_element_type) keep the 1e-2-level accuracy.
    t_op = jnp.einsum('knm,kco->mcno', mul_L, weight).reshape(N * Cin, N * Cout)
    t_op = t_op.astype(jnp.bfloat16)
    bias_row = jnp.tile(bias.reshape(1, Cout), (1, N)).astype(jnp.float32)
    x2 = x_flat.reshape(BS, N * Cin).astype(jnp.bfloat16)

    # cdiv + zero-pad so any BS works with bounded block sizes and >=2 grid steps.
    num_blocks = pl.cdiv(BS, TB)
    BS_pad = num_blocks * TB
    if BS_pad != BS:
        x2 = jnp.pad(x2, ((0, BS_pad - BS), (0, 0)))

    def buffered_specs():
        return [
            pl.BlockSpec((TB, N * Cin), lambda i: (i, 0),
                         pipeline_mode=pl.Buffered(3)),       # streaming input
            pl.BlockSpec((N * Cin, N * Cout), lambda i: (0, 0),
                         pipeline_mode=pl.Buffered(1)),       # resident constant
            pl.BlockSpec((1, N * Cout), lambda i: (0, 0),
                         pipeline_mode=pl.Buffered(1)),       # resident constant
        ]

    def plain_specs():
        return [
            pl.BlockSpec((TB, N * Cin), lambda i: (i, 0)),
            pl.BlockSpec((N * Cin, N * Cout), lambda i: (0, 0)),
            pl.BlockSpec((1, N * Cout), lambda i: (0, 0)),
        ]

    def run(in_specs):
        return pl.pallas_call(
            _cheb_kernel,
            out_shape=jax.ShapeDtypeStruct((BS_pad, N * Cout), jnp.float32),
            grid=(num_blocks,),
            in_specs=in_specs,
            out_specs=pl.BlockSpec((TB, N * Cout), lambda i: (i, 0)),
            compiler_params=pltpu.CompilerParams(
                dimension_semantics=("parallel",),
                vmem_limit_bytes=_vmem_budget_bytes(TB, N, Cin, Cout)),
        )(x2, t_op, bias_row)

    # Only a pipeline_mode incompatibility falls back; real compile/VMEM errors
    # propagate (the fallback double-buffers the bf16 operator, which still fits
    # the budget above on v7x).
    try:
        out2 = run(buffered_specs())
    except (TypeError, AttributeError, NotImplementedError):
        out2 = run(plain_specs())

    if BS_pad != BS:
        out2 = out2[:BS]
    return out2.reshape(BS, N, Cout)


# ------------------------------ JAX glue -------------------------------------

def cheb_polynomials(graph, K):
    """ChebConv.get_laplacian (normalize=True) + cheb_polynomial, in plain JAX.
    Row sums are clamped before rsqrt so an all-zero learned-graph row cannot
    NaN the Laplacians / fused operator."""
    N = graph.shape[0]
    row_sum = jnp.maximum(jnp.sum(graph, axis=-1), 1e-12)
    d = jax.lax.rsqrt(row_sum)
    L = jnp.eye(N, dtype=jnp.float32) - (d[:, None] * graph * d[None, :])
    polys = [jnp.eye(N, dtype=jnp.float32), L]
    for _ in range(2, K):
        polys.append(2.0 * (L @ polys[-1]) - polys[-2])
    return jnp.stack(polys[:K], axis=0)


def rh_forward(params, x, A):
    graph = graph_learn(A, params["w1"], params["w2"], params["beta"],
                        params["attn"], params["eps"])
    mul_L = cheb_polynomials(graph, params["K"])
    B, S, N, Cin = x.shape
    x_flat = x.reshape(B * S, N, Cin)
    return cheb_conv_relu(mul_L, params["weight"], params["bias"], x_flat)


# --------------------------- pure-JAX reference -------------------------------

def _graph_learn_ref(A, w1, w2, beta, attn_params, eps):
    m = w1 @ w2.T - w2 @ w1.T
    m = jax.nn.relu(m + jnp.diag(beta))
    attn = jax.nn.sigmoid(attn_params[0] * m + attn_params[1] * A + attn_params[2])
    m = attn * m + (1.0 - attn) * A
    d = jax.lax.rsqrt(jnp.maximum(m.sum(axis=1), 1e-12))
    m = jax.nn.relu(d[:, None] * m * d[None, :] - eps)
    d = jax.lax.rsqrt(jnp.maximum(m.sum(axis=1), 1e-12))
    return d[:, None] * m * d[None, :]


def _cheb_ref(mul_L, weight, bias, x_flat):
    r = jnp.einsum('knm,bmc->kbnc', mul_L, x_flat)
    r = jnp.einsum('kbnc,kco->kbno', r, weight)
    return jax.nn.relu(r.sum(axis=0) + bias[None])


# --------------------------------- main ---------------------------------------

if __name__ == "__main__":
    key = jax.random.PRNGKey(0)
    # small test shapes (GraphLearn hardwires num_nodes=170 in the module;
    # parametrized to N=16 for the synthetic test)
    B, S, N, Cin, Cout, k1 = 2, 8, 16, 8, 32, 2
    K = k1 + 1
    keys = jax.random.split(key, 7)

    # TODO(synk): original forward does np.load('pems08_01_adj.npy'); replaced with
    # a deterministic synthetic symmetric positive adjacency.
    U = jax.random.uniform(keys[0], (N, N), jnp.float32)
    A = 0.5 * (U + U.T) + jnp.eye(N, dtype=jnp.float32)

    # GraphLearn params
    beta = jax.random.uniform(keys[1], (N,), jnp.float32)            # torch.rand
    bound_w = 1.0 / math.sqrt(Cin)                                   # kaiming_uniform(a=sqrt(5))
    w1 = jax.random.uniform(keys[2], (N, Cin), jnp.float32, -bound_w, bound_w)
    w2 = jax.random.uniform(keys[3], (N, Cin), jnp.float32, -bound_w, bound_w)
    bound_a = 1.0 / math.sqrt(2.0)                                   # Conv2d(2,1,1) default init
    attn_params = jax.random.uniform(keys[4], (3,), jnp.float32, -bound_a, bound_a)

    # ChebConv params: weight (K+1, 1, in_c, out_c) -> stored as (K, Cin, Cout)
    fan_in, fan_out = 1 * Cin * Cout, K * Cin * Cout
    std = math.sqrt(2.0 / (fan_in + fan_out))                        # xavier_normal_
    weight = std * jax.random.normal(keys[5], (K, Cin, Cout), jnp.float32)
    bias = jnp.zeros((1, Cout), jnp.float32)                         # torch (1,1,out_c) zeros

    x = jax.random.normal(keys[6], (B, S, N, Cin), jnp.float32)

    params = dict(w1=w1, w2=w2, beta=beta, attn=attn_params,
                  eps=0.5 / N, weight=weight, bias=bias, K=K)

    out = jax.block_until_ready(rh_forward(params, x, A))

    # verify against pure-JAX f32 reference (kernel runs bf16 operands with f32
    # accumulation, so allow a bf16-level tolerance)
    graph_ref = _graph_learn_ref(A, w1, w2, beta, attn_params, 0.5 / N)
    mul_L_ref = cheb_polynomials(graph_ref, K)
    out_ref = _cheb_ref(mul_L_ref, weight, bias, x.reshape(B * S, N, Cin))

    assert out.shape == (B * S, N, Cout)
    assert bool(jnp.allclose(out, out_ref, rtol=2e-2, atol=2e-2)), (
        float(jnp.max(jnp.abs(out - out_ref))))
    print("KERNEL_OK")
</pallas_src>

<mosaic_0001>
module attributes {stable_mosaic.version = 11 : i64} {
  func.func @_graph_learn_kernel(%arg0: memref<16x16xf32, #tpu.memory_space<vmem>>, %arg1: memref<16x16xf32, #tpu.memory_space<vmem>>, %arg2: memref<16x16xf32, #tpu.memory_space<vmem>>, %arg3: memref<1x16xf32, #tpu.memory_space<vmem>>, %arg4: memref<3xf32, #tpu.memory_space<smem>>, %arg5: memref<1xf32, #tpu.memory_space<smem>>, %arg6: memref<16x16xf32, #tpu.memory_space<vmem>>) attributes {dimension_semantics = [], scalar_prefetch = 0 : i64, scratch_operands = 0 : i64, tpu.core_type = #tpu.core_type<tc>} {
    %c0 = arith.constant 0 : index
    %c0_0 = arith.constant 0 : index
    %0 = vector.load %arg0[%c0, %c0_0] : memref<16x16xf32, #tpu.memory_space<vmem>>, vector<16x16xf32>
    %1 = tpu.iota {dimensions = array<i32: 0>} : vector<16x16xi32>
    %2 = tpu.iota {dimensions = array<i32: 1>} : vector<16x16xi32>
    %3 = arith.cmpi eq, %1, %2 : vector<16x16xi32>
    %c0_1 = arith.constant 0 : index
    %c0_2 = arith.constant 0 : index
    %4 = vector.load %arg1[%c0_1, %c0_2] : memref<16x16xf32, #tpu.memory_space<vmem>>, vector<16x16xf32>
    %c0_3 = arith.constant 0 : index
    %c0_4 = arith.constant 0 : index
    %5 = vector.load %arg2[%c0_3, %c0_4] : memref<16x16xf32, #tpu.memory_space<vmem>>, vector<16x16xf32>
    %cst = arith.constant dense<0.000000e+00> : vector<16x16xf32>
    %6 = tpu.matmul %4, %5, %cst {dimension_numbers = #tpu.dot_dimension_numbers<[1], [0], [0], [1], [0, 0, 1, 1], [], []>} : vector<16x16xf32>, vector<16x16xf32>, vector<16x16xf32> -> vector<16x16xf32>
    %c0_5 = arith.constant 0 : index
    %c0_6 = arith.constant 0 : index
    %7 = vector.load %arg3[%c0_5, %c0_6] : memref<1x16xf32, #tpu.memory_space<vmem>>, vector<1x16xf32>
    %cst_7 = arith.constant 0.000000e+00 : f32
    %8 = vector.shape_cast %7 : vector<1x16xf32> to vector<1x16xf32>
    %9 = vector.broadcast %8 : vector<1x16xf32> to vector<16x16xf32>
    %10 = vector.broadcast %cst_7 : f32 to vector<16x16xf32>
    %11 = arith.select %3, %9, %10 : vector<16x16xi1>, vector<16x16xf32>
    %12 = arith.addf %6, %11 : vector<16x16xf32>
    %cst_8 = arith.constant 0.000000e+00 : f32
    %13 = vector.broadcast %cst_8 : f32 to vector<16x16xf32>
    %14 = arith.maximumf %12, %13 : vector<16x16xf32>
    %c0_9 = arith.constant 0 : index
    %15 = memref.load %arg4[%c0_9] : memref<3xf32, #tpu.memory_space<smem>>
    %c1 = arith.constant 1 : index
    %16 = memref.load %arg4[%c1] : memref<3xf32, #tpu.memory_space<smem>>
    %c2 = arith.constant 2 : index
    %17 = memref.load %arg4[%c2] : memref<3xf32, #tpu.memory_space<smem>>
    %18 = vector.broadcast %15 : f32 to vector<16x16xf32>
    %19 = arith.mulf %18, %14 : vector<16x16xf32>
    %20 = vector.broadcast %16 : f32 to vector<16x16xf32>
    %21 = arith.mulf %20, %0 : vector<16x16xf32>
    %22 = arith.addf %19, %21 : vector<16x16xf32>
    %23 = vector.broadcast %17 : f32 to vector<16x16xf32>
    %24 = arith.addf %22, %23 : vector<16x16xf32>
    %25 = arith.negf %24 : vector<16x16xf32>
    %26 = math.exp %25 : vector<16x16xf32>
    %cst_10 = arith.constant 1.000000e+00 : f32
    %27 = vector.broadcast %cst_10 : f32 to vector<16x16xf32>
    %28 = arith.addf %27, %26 : vector<16x16xf32>
    %29 = arith.divf %27, %28 : vector<16x16xf32>
    %30 = arith.mulf %29, %14 : vector<16x16xf32>
    %cst_11 = arith.constant 1.000000e+00 : f32
    %31 = vector.broadcast %cst_11 : f32 to vector<16x16xf32>
    %32 = arith.subf %31, %29 : vector<16x16xf32>
    %33 = arith.mulf %32, %0 : vector<16x16xf32>
    %34 = arith.addf %30, %33 : vector<16x16xf32>
    %c0_12 = arith.constant 0 : index
    %35 = memref.load %arg5[%c0_12] : memref<1xf32, #tpu.memory_space<smem>>
    %cst_13 = arith.constant dense<0.000000e+00> : vector<16xf32>
    %36 = vector.multi_reduction <add>, %34, %cst_13 [1] : vector<16x16xf32> to vector<16xf32>
    %37 = vector.shape_cast %36 : vector<16xf32> to vector<16x1xf32>
    %cst_14 = arith.constant 9.99999996E-13 : f32
    %38 = vector.broadcast %cst_14 : f32 to vector<16x1xf32>
    %39 = arith.maximumf %37, %38 : vector<16x1xf32>
    %40 = math.rsqrt %39 : vector<16x1xf32>
    %cst_15 = arith.constant 0.000000e+00 : f32
    %41 = vector.shape_cast %40 : vector<16x1xf32> to vector<16x1xf32>
    %42 = vector.broadcast %41 : vector<16x1xf32> to vector<16x16xf32>
    %43 = vector.broadcast %cst_15 : f32 to vector<16x16xf32>
    %44 = arith.select %3, %42, %43 : vector<16x16xi1>, vector<16x16xf32>
    %cst_16 = arith.constant dense<0.000000e+00> : vector<16xf32>
    %45 = vector.multi_reduction <add>, %44, %cst_16 [0] : vector<16x16xf32> to vector<16xf32>
    %46 = vector.shape_cast %45 : vector<16xf32> to vector<1x16xf32>
    %47 = vector.broadcast %40 : vector<16x1xf32> to vector<16x16xf32>
    %48 = arith.mulf %34, %47 : vector<16x16xf32>
    %49 = vector.broadcast %46 : vector<1x16xf32> to vector<16x16xf32>
    %50 = arith.mulf %48, %49 : vector<16x16xf32>
    %51 = vector.broadcast %35 : f32 to vector<16x16xf32>
    %52 = arith.subf %50, %51 : vector<16x16xf32>
    %cst_17 = arith.constant 0.000000e+00 : f32
    %53 = vector.broadcast %cst_17 : f32 to vector<16x16xf32>
    %54 = arith.maximumf %52, %53 : vector<16x16xf32>
    %cst_18 = arith.constant dense<0.000000e+00> : vector<16xf32>
    %55 = vector.multi_reduction <add>, %54, %cst_18 [1] : vector<16x16xf32> to vector<16xf32>
    %56 = vector.shape_cast %55 : vector<16xf32> to vector<16x1xf32>
    %cst_19 = arith.constant 9.99999996E-13 : f32
    %57 = vector.broadcast %cst_19 : f32 to vector<16x1xf32>
    %58 = arith.maximumf %56, %57 : vector<16x1xf32>
    %59 = math.rsqrt %58 : vector<16x1xf32>
    %cst_20 = arith.constant 0.000000e+00 : f32
    %60 = vector.shape_cast %59 : vector<16x1xf32> to vector<16x1xf32>
    %61 = vector.broadcast %60 : vector<16x1xf32> to vector<16x16xf32>
    %62 = vector.broadcast %cst_20 : f32 to vector<16x16xf32>
    %63 = arith.select %3, %61, %62 : vector<16x16xi1>, vector<16x16xf32>
    %cst_21 = arith.constant dense<0.000000e+00> : vector<16xf32>
    %64 = vector.multi_reduction <add>, %63, %cst_21 [0] : vector<16x16xf32> to vector<16xf32>
    %65 = vector.shape_cast %64 : vector<16xf32> to vector<1x16xf32>
    %66 = vector.broadcast %59 : vector<16x1xf32> to vector<16x16xf32>
    %67 = arith.mulf %54, %66 : vector<16x16xf32>
    %68 = vector.broadcast %65 : vector<1x16xf32> to vector<16x16xf32>
    %69 = arith.mulf %67, %68 : vector<16x16xf32>
    %c0_22 = arith.constant 0 : index
    %c0_23 = arith.constant 0 : index
    %70 = vector.load %arg6[%c0_22, %c0_23] : memref<16x16xf32, #tpu.memory_space<vmem>>, vector<16x16xf32>
    tpu.vector_store %arg6[%c0_22, %c0_23], %69 {strides = array<i32>} : memref<16x16xf32, #tpu.memory_space<vmem>>, vector<16x16xf32>,
    return
  }
}

</mosaic_0001>

<llo_original>
// kernel: tpu_custom_call.1
$region0: #{tpu_custom_call.1}
  #allocation0 [shape = 'u32[]', space=smem, size = 0x4, offset = 0x4, fixed_abs, tag = 'smem constant byte address 0x4 - core index']
  #allocation1 [shape = 'u32[144,128]{1,0:T(1,128)}', space=vmem, size = 0x12000, scoped, tag = 'internal scratch']
  #allocation2 [shape = 'f32[1]{0:T(128)S(6)}', space=smem, size = 0x200, scoped, tag = 'scoped memory for tpu_custom_call.1']
  %s0 = inlined_call_operand.hbm [shape: f32[16,16], index: 0, kind: input, shape index: {}]
  %s1 = inlined_call_operand.hbm [shape: f32[16,16], index: 1, kind: input, shape index: {}]
  %s2 = inlined_call_operand.hbm [shape: f32[16,16], index: 2, kind: input, shape index: {}]
  %s3 = inlined_call_operand.vmem [shape: f32[1,16], index: 3, kind: input, shape index: {}]
  %s4 = inlined_call_operand.vmem [shape: f32[3], index: 4, kind: input, shape index: {}]
  %s5 = inlined_call_operand.<no memory space> [shape: f32[1], index: 5, kind: input, shape index: {}]
  %s6 = inlined_call_operand.hbm [shape: f32[16,16], index: 6, kind: output, shape index: {}]
  %s7 = sld [smem:[#allocation0]]
  $region50: #{tpu_custom_call.1} parent=0
    _
  %s9 = ssub.s32 1, %s7
  %s10 = scalar_select 0, %s9, %s7
  %11 = sst [smem:[#allocation2]] %s5
  $region1: #{tpu_custom_call.1} parent=0
    #allocation3 [shape = 'u8[8192]{0}', space=vmem, size = 0x2000, scoped, tag = 'input window, operand 0, single buffered']
    #allocation4 [shape = 's32[1]{0}', space=sflag, size = 0x4, scoped, tag = 'scoped memory for tpu_custom_call.1']
    #allocation5 [shape = 's32[1]{0}', space=sflag, size = 0x4, scoped, tag = 'scoped memory for tpu_custom_call.1']
    #allocation6 [shape = 's32[1]{0}', space=sflag, size = 0x4, scoped, tag = 'scoped memory for tpu_custom_call.1']
    #allocation7 [shape = 'u8[8192]{0}', space=vmem, size = 0x2000, scoped, tag = 'input window, operand 1, single buffered']
    #allocation8 [shape = 's32[1]{0}', space=sflag, size = 0x4, scoped, tag = 'scoped memory for tpu_custom_call.1']
    #allocation9 [shape = 'u8[8192]{0}', space=vmem, size = 0x2000, scoped, tag = 'input window, operand 2, single buffered']
    #allocation10 [shape = 'u8[512]{0}', space=smem, size = 0x200, scoped, tag = 'input window, operand 4, single buffered']
    #allocation11 [shape = 'u8[8192]{0}', space=vmem, size = 0x2000, scoped, tag = 'output window, operand 0, single buffered']
    %12 = vsyncpa [#allocation4], 0
    %13 = vsyncpa [#allocation8], 0
    %14 = vsyncpa [#allocation6], 0
    %15 = vsyncpa [#allocation5], 0
    // Predicated region
    $region2: #{tpu_custom_call.1} parent=1 // pred_check
      _
    $region3: #{tpu_custom_call.1} parent=1 // pred_check_branch
      %17 = sbr.rel (0) target = $region5
    $region4: #{tpu_custom_call.1} parent=1 // pred_region
      %s19 = ssub.s32 256, 256
      %20 = vsyncadd [#allocation4], %s19
      %s21 = sshll.u32 [#allocation3], 4
      %s22 = int_to_ptr.vmem [resolvable:$true] %s21
      %27 = dma.hbm_to_vmem [thread:$0]  %s0, 256, %s22, [#allocation4], 128, 128, 8
    $region5: #{tpu_custom_call.1} parent=1 // pred_fallthru
      _
    // Predicated region
    $region6: #{tpu_custom_call.1} parent=1 // pred_check
      _
    $region7: #{tpu_custom_call.1} parent=1 // pred_check_branch
      %29 = sbr.rel (0) target = $region9
    $region8: #{tpu_custom_call.1} parent=1 // pred_region
      %s31 = ssub.s32 256, 256
      %32 = vsyncadd [#allocation8], %s31
      %s33 = sshll.u32 [#allocation7], 4
      %s34 = int_to_ptr.vmem [resolvable:$true] %s33
      %39 = dma.hbm_to_vmem [thread:$0]  %s1, 256, %s34, [#allocation8], 128, 128, 8
    $region9: #{tpu_custom_call.1} parent=1 // pred_fallthru
      _
    // Predicated region
    $region10: #{tpu_custom_call.1} parent=1 // pred_check
      _
    $region11: #{tpu_custom_call.1} parent=1 // pred_check_branch
      %41 = sbr.rel (0) target = $region13
    $region12: #{tpu_custom_call.1} parent=1 // pred_region
      %s43 = ssub.s32 256, 256
      %44 = vsyncadd [#allocation8], %s43
      %s45 = sshll.u32 [#allocation9], 4
      %s46 = int_to_ptr.vmem [resolvable:$true] %s45
      %51 = dma.hbm_to_vmem [thread:$0]  %s2, 256, %s46, [#allocation8], 128, 128, 8
    $region13: #{tpu_custom_call.1} parent=1 // pred_fallthru
      _
    // Predicated region
    $region14: #{tpu_custom_call.1} parent=1 // pred_check
      _
    $region15: #{tpu_custom_call.1} parent=1 // pred_check_branch
      %53 = sbr.rel (0) target = $region17
    $region16: #{tpu_custom_call.1} parent=1 // pred_region
      _
    $region17: #{tpu_custom_call.1} parent=1 // pred_fallthru
      _
    // Predicated region
    $region18: #{tpu_custom_call.1} parent=1 // pred_check
      _
    $region19: #{tpu_custom_call.1} parent=1 // pred_check_branch
      %55 = sbr.rel (0) target = $region21
    $region20: #{tpu_custom_call.1} parent=1 // pred_region
      %s57 = ssub.s32 16, 16
      %58 = vsyncadd [#allocation6], %s57
      %s60 = sshll.u32 %s4, 4
      %s61 = int_to_ptr.vmem [resolvable:$true] %s60
      %63 = dma.vmem_to_smem %s61, 16, [#allocation10], [#allocation6]
    $region21: #{tpu_custom_call.1} parent=1 // pred_fallthru
      _
    // Predicated region
    $region22: #{tpu_custom_call.1} parent=1 // pred_check
      _
    $region23: #{tpu_custom_call.1} parent=1 // pred_check_branch
      %65 = sbr.rel (0) target = $region25
    $region24: #{tpu_custom_call.1} parent=1 // pred_region
      _
    $region25: #{tpu_custom_call.1} parent=1 // pred_fallthru
      _
    // Predicated region
    $region26: #{tpu_custom_call.1} parent=1 // pred_check
      _
    $region27: #{tpu_custom_call.1} parent=1 // pred_check_branch
      %67 = sbr.rel (0) target = $region29
    $region28: #{tpu_custom_call.1} parent=1 // pred_region
      %68 = dma.done [#allocation4], 256
    $region29: #{tpu_custom_call.1} parent=1 // pred_fallthru
      _
    // Predicated region
    $region30: #{tpu_custom_call.1} parent=1 // pred_check
      _
    $region31: #{tpu_custom_call.1} parent=1 // pred_check_branch
      %70 = sbr.rel (0) target = $region33
    $region32: #{tpu_custom_call.1} parent=1 // pred_region
      %71 = dma.done [#allocation8], 256
    $region33: #{tpu_custom_call.1} parent=1 // pred_fallthru
      _
    // Predicated region
    $region34: #{tpu_custom_call.1} parent=1 // pred_check
      _
    $region35: #{tpu_custom_call.1} parent=1 // pred_check_branch
      %73 = sbr.rel (0) target = $region37
    $region36: #{tpu_custom_call.1} parent=1 // pred_region
      %74 = dma.done [#allocation8], 256
    $region37: #{tpu_custom_call.1} parent=1 // pred_fallthru
      _
    // Predicated region
    $region38: #{tpu_custom_call.1} parent=1 // pred_check
      _
    $region39: #{tpu_custom_call.1} parent=1 // pred_check_branch
      %76 = sbr.rel (0) target = $region41
    $region40: #{tpu_custom_call.1} parent=1 // pred_region
      %77 = dma.done [#allocation6], 16
    $region41: #{tpu_custom_call.1} parent=1 // pred_fallthru
      _
    %78 = sfence
    %v79 = vld [vmem:[#allocation3] sm:$0xff]
    %v80 = vld [vmem:[#allocation3 + $0x8] sm:$0xff]
    %v81 = vlaneseq
    %v82 = vshrl.u32 %v81, 7
    %v83 = vadd.s32 %v82, 8
    %v84 = vlaneseq
    %v85 = vand.u32 %v84, 127
    %vm86 = vcmp.eq.s32.totalorder %v82, %v85
    %vm87 = vcmp.eq.s32.totalorder %v83, %v85
    %v88 = vld [vmem:[#allocation7] sm:$0xff]
    %v89 = vld [vmem:[#allocation7 + $0x8] sm:$0xff]
    %v90 = vld [vmem:[#allocation9] sm:$0xff]
    %v91 = vld [vmem:[#allocation9 + $0x8] sm:$0xff]
    %v92 = vld [vmem:[%s3] sm:$0x1]
    %v94 = vlaneseq
    %v95 = vshrl.u32 %v94, 7
    %v96 = vsub.s32 0, %v95
    %v97 = vrot.slane %v92, %v96
    %v99 = vsel %vm86, %v97, 0.0
    %v100 = vsel %vm87, %v97, 0.0
    %vm101 = vcmask 130048
    %v103 = vsel %vm101, %v88, 0
    %v106 = vsel %vm101, %v89, 0
    %108 = vmatprep.subr.mxu0 0.0
    %109 = vmatpush1.msra.mxu0 %v90
    %110 = vmatprep.subr.mxu0 0.0
    %111 = vmatpush1.msra.mxu0 %v91
    %112 = vmatprep.subr.mxu0 0.0
    %113 = vmatpush1.msra.mxu0 0.0
    %114 = vmatprep.subr.mxu0 0.0
    %115 = vmatpush1.msra.mxu0 0.0
    %116 = vmatprep.subr.mxu0 0.0
    %117 = vmatpush1.msra.mxu0 0.0
    %118 = vmatprep.subr.mxu0 0.0
    %119 = vmatpush1.msra.mxu0 0.0
    %120 = vmatprep.subr.mxu0 0.0
    %121 = vmatpush1.msra.mxu0 0.0
    %122 = vmatprep.subr.mxu0 0.0
    %123 = vmatpush1.msra.mxu0 0.0
    %124 = vmatprep.subr.mxu0 0.0
    %125 = vmatpush1.msra.mxu0 0.0
    %126 = vmatprep.subr.mxu0 0.0
    %127 = vmatpush1.msra.mxu0 0.0
    %128 = vmatprep.subr.mxu0 0.0
    %129 = vmatpush1.msra.mxu0 0.0
    %130 = vmatprep.subr.mxu0 0.0
    %131 = vmatpush1.msra.mxu0 0.0
    %132 = vmatprep.subr.mxu0 0.0
    %133 = vmatpush1.msra.mxu0 0.0
    %134 = vmatprep.subr.mxu0 0.0
    %135 = vmatpush1.msra.mxu0 0.0
    %136 = vmatprep.subr.mxu0 0.0
    %137 = vmatpush1.msra.mxu0 0.0
    %138 = vmatprep.subr.mxu0 0.0
    %139 = vmatpush1.msra.mxu0 0.0
    %140 = vmatprep.subr.mxu0 0.0
    %141 = vmatpush1.msra.mxu0 0.0
    %142 = vmatprep.subr.mxu0 0.0
    %143 = vmatpush1.msra.mxu0 0.0
    %144 = vmatprep.subr.mxu0 0.0
    %145 = vmatpush1.msra.mxu0 0.0
    %146 = vmatprep.subr.mxu0 0.0
    %147 = vmatpush1.msra.mxu0 0.0
    %148 = vmatprep.subr.mxu0 0.0
    %149 = vmatpush1.msra.mxu0 0.0
    %150 = vmatprep.subr.mxu0 0.0
    %151 = vmatpush1.msra.mxu0 0.0
    %152 = vmatprep.subr.mxu0 0.0
    %153 = vmatpush1.msra.mxu0 0.0
    %154 = vmatprep.subr.mxu0 0.0
    %155 = vmatpush1.msra.mxu0 0.0
    %156 = vmatprep.subr.mxu0 0.0
    %157 = vmatpush1.msra.mxu0 0.0
    %158 = vmatprep.subr.mxu0 0.0
    %159 = vmatpush1.msra.mxu0 0.0
    %160 = vmatprep.subr.mxu0 0.0
    %161 = vmatpush1.msra.mxu0 0.0
    %162 = vmatprep.subr.mxu0 0.0
    %163 = vmatpush1.msra.mxu0 0.0
    %164 = vmatprep.subr.mxu0 0.0
    %165 = vmatpush1.msra.mxu0 0.0
    %166 = vmatprep.subr.mxu0 0.0
    %167 = vmatpush1.msra.mxu0 0.0
    %168 = vmatprep.subr.mxu0 0.0
    %169 = vmatpush1.msra.mxu0 0.0
    %170 = vmatprep.subr.mxu0 0.0
    %171 = vmatpush1.msra.mxu0 0.0
    %172 = vmatprep.mubr.f32.mxu0 0.0
    %173 = vmatmul.mubr.f32.gmra.mrb[0].mxu0 %v103
    %v174 = vpop.f32.mrb[0].mxu0
    %v175 = vadd.f32 %v99, %v174
    %v176 = vpop.f32.mrb[0].mxu0
    %177 = vmatprep.mubr.f32.mxu0 0.0
    %178 = vmatmul.mubr.f32.gmra.mrb[0].mxu0 %v106
    %v179 = vpop.f32.mrb[0].mxu0
    %v180 = vadd.f32 %v100, %v179
    %v181 = vpop.f32.mrb[0].mxu0
    %182 = vdwg.mxu0
    %v183 = vmax.f32 %v175, 0.0
    %v184 = vmax.f32 %v180, 0.0
    %s185 = sld [smem:[#allocation10]]
    %s186 = sld [smem:[#allocation10 + $0x1]]
    %s187 = sld [smem:[#allocation10 + $0x2]]
    %v188 = vstv %s185
    %v189 = vmul.f32 %v188, %v183
    %v190 = vmul.f32 %v188, %v184
    %v191 = vstv %s186
    %v192 = vmul.f32 %v191, %v79
    %v193 = vmul.f32 %v191, %v80
    %v194 = vadd.f32 %v189, %v192
    %v195 = vadd.f32 %v190, %v193
    %v196 = vstv %s187
    %v197 = vadd.f32 %v194, %v196
    %v198 = vadd.f32 %v195, %v196
    %v199 = vxor.u32 %v197, 2147483648
    %v200 = vxor.u32 %v198, 2147483648
    %v201 = vmul.f32 %v199, 1.442695
    %v202 = vpow.pop %v201
    %v203 = vmul.f32 %v200, 1.442695
    %v204 = vpow.pop %v203
    %v205 = vadd.f32 %v202, 1.0
    %v206 = vadd.f32 %v204, 1.0
    %v207 = vrcp.pop %v205
    %v208 = vmul.f32 1.0, %v207
    %v209 = vrcp.pop %v206
    %v210 = vmul.f32 1.0, %v209
    %v211 = vmul.f32 %v208, %v183
    %v212 = vmul.f32 %v210, %v184
    %v213 = vsub.f32 1.0, %v208
    %v214 = vsub.f32 1.0, %v210
    %v215 = vmul.f32 %v213, %v79
    %v216 = vmul.f32 %v214, %v80
    %v217 = vadd.f32 %v211, %v215
    %v218 = vadd.f32 %v212, %v216
    %s219 = sld [smem:[#allocation2]]
    %v220 = vsel %vm101, %v217, 0.0
    %221 = vadd.xlane.f32.xlu0 %v220
    %v222 = vpop.xlane.xlu0 %221
    %v223 = vsel %vm101, %v218, 0.0
    %224 = vadd.xlane.f32.xlu0 %v223
    %v225 = vpop.xlane.xlu0 %224
    %v226 = vmax.f32 %v222, 1e-12
    %v227 = vmax.f32 %v225, 1e-12
    %v228 = vrsqrt.pop %v226
    %v229 = vrsqrt.pop %v227
    %v230 = vsel %vm86, %v228, 0.0
    %v231 = vsel %vm87, %v229, 0.0
    %v232 = vsel %vm101, %v230, 0.0
    %v233 = vsel %vm101, %v231, 0.0
    %v234 = vadd.f32 %v232, %v233
    %v235 = vrot.slane %v234, 4
    %v236 = vadd.f32 %v234, %v235
    %v237 = vrot.slane %v236, 2
    %v238 = vadd.f32 %v236, %v237
    %v239 = vrot.slane %v238, 1
    %v240 = vadd.f32 %v238, %v239
    %v241 = vmul.f32 %v217, %v228
    %v242 = vmul.f32 %v218, %v229
    %v243 = vmul.f32 %v241, %v240
    %v244 = vmul.f32 %v242, %v240
    %v245 = vstv %s219
    %v246 = vsub.f32 %v243, %v245
    %v247 = vsub.f32 %v244, %v245
    %v248 = vmax.f32 %v246, 0.0
    %v249 = vmax.f32 %v247, 0.0
    %v250 = vsel %vm101, %v248, 0.0
    %251 = vadd.xlane.f32.xlu0 %v250
    %v252 = vpop.xlane.xlu0 %251
    %v253 = vsel %vm101, %v249, 0.0
    %254 = vadd.xlane.f32.xlu0 %v253
    %v255 = vpop.xlane.xlu0 %254
    %v256 = vmax.f32 %v252, 1e-12
    %v257 = vmax.f32 %v255, 1e-12
    %v258 = vrsqrt.pop %v256
    %v259 = vrsqrt.pop %v257
    %v260 = vsel %vm86, %v258, 0.0
    %v261 = vsel %vm87, %v259, 0.0
    %v262 = vsel %vm101, %v260, 0.0
    %v263 = vsel %vm101, %v261, 0.0
    %v264 = vadd.f32 %v262, %v263
    %v265 = vrot.slane %v264, 4
    %v266 = vadd.f32 %v264, %v265
    %v267 = vrot.slane %v266, 2
    %v268 = vadd.f32 %v266, %v267
    %v269 = vrot.slane %v268, 1
    %v270 = vadd.f32 %v268, %v269
    %v271 = vmul.f32 %v248, %v258
    %v272 = vmul.f32 %v249, %v259
    %v273 = vmul.f32 %v271, %v270
    %v274 = vmul.f32 %v272, %v270
    %275 = vst.msk [vmem:[#allocation11] sm:$0xff] %vm101, %v273
    %276 = vst.msk [vmem:[#allocation11 + $0x8] sm:$0xff] %vm101, %v274
    // Predicated region
    $region42: #{tpu_custom_call.1} parent=1 // pred_check
      _
    $region43: #{tpu_custom_call.1} parent=1 // pred_check_branch
      %278 = sbr.rel (0) target = $region45
    $region44: #{tpu_custom_call.1} parent=1 // pred_region
      %s280 = ssub.s32 256, 256
      %281 = vsyncadd [#allocation5], %s280
      %s282 = sshll.u32 [#allocation11], 4
      %s283 = int_to_ptr.vmem [resolvable:$true] %s282
      %288 = dma.vmem_to_hbm [thread:$0]  %s283, 256, %s6, [#allocation5], 128, 128, 8
    $region45: #{tpu_custom_call.1} parent=1 // pred_fallthru
      _
    // Predicated region
    $region46: #{tpu_custom_call.1} parent=1 // pred_check
      _
    $region47: #{tpu_custom_call.1} parent=1 // pred_check_branch
      %290 = sbr.rel (0) target = $region49
    $region48: #{tpu_custom_call.1} parent=1 // pred_region
      %291 = dma.done [#allocation5], 256
    $region49: #{tpu_custom_call.1} parent=1 // pred_fallthru
      _
    %292 = vsyncpa [#allocation4], 1
    %293 = vsyncpa [#allocation8], 1
    %294 = vsyncpa [#allocation5], 1
    %295 = vsyncpa [#allocation6], 1

</llo_original>
